<compile_context>
chip_gen: v7x
topology: tpu7x:2x2x1
jax: 0.10.0
libtpu: 0.0.40
codegen_flags: <defaults>
</compile_context>

<pallas_src>
import functools

import jax
import jax.numpy as jnp
import numpy as np
from jax.experimental import pallas as pl
from jax.experimental.pallas import tpu as pltpu


def _replication_matrix(w: int, s: int) -> np.ndarray:
    """R of shape (W, s*W*s): x_row @ R == s concatenated copies of
    repeat_interleave(x_row, s) — i.e. the s upsampled output rows that one
    input row produces, laid out contiguously."""
    ws = w * s
    r = np.zeros((w, ws), dtype=np.float32)
    r[np.arange(ws) // s, np.arange(ws)] = 1.0      # lane interleave W -> W*s
    return np.tile(r, (1, s))                       # s output rows per input row


def _upsample_fast_kernel(r_ref, x_ref, o_ref):
    # bf16 path: 0/1 selection matmul is already exact at default MXU precision.
    o_ref[...] = jnp.dot(
        x_ref[...], r_ref[...], preferred_element_type=jnp.float32
    ).astype(o_ref.dtype)


def _upsample_exact_kernel(r_ref, x_ref, o_ref, xk_ref):
    # f32/f16 path: split each element into three bf16-representable pieces
    # (hi + mid + lo == x exactly, Veltkamp-style), so the MXU's bf16 operand
    # truncation is the identity and the 0/1 selection matmul is an exact copy.
    x = x_ref[...].astype(jnp.float32)
    hi = x.astype(jnp.bfloat16).astype(jnp.float32)
    rem = x - hi
    mid = rem.astype(jnp.bfloat16).astype(jnp.float32)
    lo = rem - mid
    w = x.shape[-1]
    xk_ref[:, :w] = hi
    xk_ref[:, w:2 * w] = mid
    xk_ref[:, 2 * w:3 * w] = lo
    o_ref[...] = jnp.dot(
        xk_ref[...], r_ref[...], preferred_element_type=jnp.float32
    ).astype(o_ref.dtype)


def _pad_to(v: int, m: int) -> int:
    return ((v + m - 1) // m) * m


def _pick_row_block(rows: int, out_row_bytes: int, align: int,
                    total_out_bytes: int) -> int:
    """Rows per grid step: ~4 MiB of padded output, sublane/MXU aligned."""
    if rows <= align:
        return rows
    target = max(align, (4 << 20) // out_row_bytes)
    if target >= rows:
        # Whole problem fits in one block; split in two for megacore / v7x's
        # 2 TensorCores once there is enough work to be worth a second step.
        if total_out_bytes > (1 << 20) and rows >= 2 * align:
            return min(rows, _pad_to((rows + 1) // 2, align))
        return rows
    if target >= 256:
        return (target // 256) * 256
    return max(align, (target // align) * align)


@functools.partial(jax.jit, static_argnames=("scale_factor",))
def upsample_nearest(x: jnp.ndarray, scale_factor=2) -> jnp.ndarray:
    """Equivalent of F.interpolate(x, scale_factor=s, mode='nearest'), NCHW."""
    assert x.ndim == 4, "expected NCHW input"
    s = int(scale_factor)
    assert s >= 1 and float(scale_factor) == float(s), (
        "only positive integer scale factors are supported")
    if not jnp.issubdtype(x.dtype, jnp.floating):
        # TODO(synk): integer nearest-upsample (pure gather/copy path) not implemented.
        raise TypeError(f"upsample_nearest expects a float dtype, got {x.dtype}")
    if s == 1:
        return x

    n, c, h, w = x.shape
    hs, ws = h * s, w * s
    rows = n * c * h                       # fold H into the row dimension
    ocols = s * ws                         # the s upsampled rows per input row
    dt = x.dtype
    itemsize = dt.itemsize

    exact = dt != jnp.bfloat16             # bf16 is already exact on the fast path
    r_np = _replication_matrix(w, s)
    if exact:
        r_np = np.concatenate([r_np] * 3, axis=0)    # (3W, ocols) for hi/mid/lo
        r_mat = jnp.asarray(r_np, dtype=jnp.float32)
        kernel = _upsample_exact_kernel
    else:
        r_mat = jnp.asarray(r_np, dtype=dt)
        kernel = _upsample_fast_kernel
    k_dim = r_mat.shape[0]

    x2 = x.reshape(rows, w)                # free reshape (row-major contiguous)

    out_row_bytes = _pad_to(ocols, 128) * itemsize
    total_out_bytes = rows * ocols * itemsize
    align = 8 if itemsize >= 4 else 16
    m_blk = _pick_row_block(rows, out_row_bytes, align, total_out_bytes)
    grid = (pl.cdiv(rows, m_blk),)

    scratch_shapes = []
    if exact:
        scratch_shapes.append(pltpu.VMEM((m_blk, k_dim), jnp.float32))

    # VMEM: double-buffered x/out blocks + (tiny, resident) R + split scratch.
    vmem_bytes = (
        2 * m_blk * (_pad_to(w, 128) + _pad_to(ocols, 128)) * itemsize
        + 2 * _pad_to(k_dim, 8) * _pad_to(ocols, 128) * r_mat.dtype.itemsize
        + (m_blk * _pad_to(k_dim, 128) * 4 if exact else 0)
        + (2 << 20))
    vmem_bytes = int(min(max(vmem_bytes, 32 << 20), 56 << 20))

    cost = pl.CostEstimate(
        flops=2 * rows * k_dim * ocols,
        transcendentals=0,
        bytes_accessed=(rows * w + rows * ocols) * itemsize
        + r_mat.size * r_mat.dtype.itemsize,
    )

    out2 = pl.pallas_call(
        kernel,
        out_shape=jax.ShapeDtypeStruct((rows, ocols), dt),
        grid=grid,
        in_specs=[
            pl.BlockSpec((k_dim, ocols), lambda i: (0, 0)),   # tiny R, resident
            pl.BlockSpec((m_blk, w), lambda i: (i, 0)),       # input row block
        ],
        out_specs=pl.BlockSpec((m_blk, ocols), lambda i: (i, 0)),
        scratch_shapes=scratch_shapes,
        compiler_params=pltpu.CompilerParams(
            dimension_semantics=("parallel",),
            vmem_limit_bytes=vmem_bytes,
        ),
        cost_estimate=cost,
    )(r_mat, x2)

    # (rows, s*Ws) is a free, contiguous view of (N, C, Hs, Ws).
    return out2.reshape(n, c, hs, ws)


class Upsample:
    """Mirror of the PyTorch darknet Upsample; mode must be 'nearest'."""

    def __init__(self, scale_factor=1, mode="nearest"):
        assert mode == "nearest", "only nearest mode implemented"
        # TODO(synk): non-integer scale factors / 'bilinear' etc. not implemented.
        self.scale_factor = scale_factor
        self.mode = mode

    def __call__(self, x):
        return upsample_nearest(x, scale_factor=self.scale_factor)


if __name__ == "__main__":
    key = jax.random.PRNGKey(0)
    x = jax.random.normal(key, (2, 4, 16, 16), dtype=jnp.float32)

    mod = Upsample(scale_factor=2, mode="nearest")
    y = jax.block_until_ready(mod(x))

    # Reference: plain-JAX nearest upsample (matches F.interpolate nearest).
    ref = jnp.repeat(jnp.repeat(x, 2, axis=2), 2, axis=3)
    assert y.shape == (2, 4, 32, 32), y.shape
    np.testing.assert_allclose(np.asarray(y), np.asarray(ref), rtol=0, atol=0)

    # Fast (bf16) path sanity check — also exact for 0/1 selection.
    xb = x.astype(jnp.bfloat16)
    yb = jax.block_until_ready(mod(xb))
    refb = jnp.repeat(jnp.repeat(xb, 2, axis=2), 2, axis=3)
    np.testing.assert_allclose(
        np.asarray(yb.astype(jnp.float32)),
        np.asarray(refb.astype(jnp.float32)),
        rtol=0, atol=0)

    print("KERNEL_OK")
</pallas_src>

<mosaic_0001>
module attributes {stable_mosaic.version = 11 : i64} {
  func.func @_upsample_exact_kernel(%arg0: i32, %arg1: memref<48x64xf32, #tpu.memory_space<vmem>>, %arg2: memref<128x16xf32, #tpu.memory_space<vmem>>, %arg3: memref<128x64xf32, #tpu.memory_space<vmem>>, %arg4: memref<128x48xf32, #tpu.memory_space<vmem>>) attributes {dimension_semantics = [#tpu.dimension_semantics<parallel>], iteration_bounds = array<i64: 1>, scalar_prefetch = 0 : i64, scratch_operands = 1 : i64, tpu.core_type = #tpu.core_type<tc>, window_params = [{pipeline_mode = #tpu.pipeline_mode<synchronous>, transform_indices = @transform_0, window_bounds = array<i64: 48, 64>}, {transform_indices = @transform_1, window_bounds = array<i64: 128, 16>}, {transform_indices = @transform_2, window_bounds = array<i64: 128, 64>}]} {
    %c0 = arith.constant 0 : index
    %c0_0 = arith.constant 0 : index
    %0 = vector.load %arg2[%c0, %c0_0] : memref<128x16xf32, #tpu.memory_space<vmem>>, vector<128x16xf32>
    %1 = arith.truncf %0 : vector<128x16xf32> to vector<128x16xbf16>
    %2 = arith.extf %1 : vector<128x16xbf16> to vector<128x16xf32>
    %3 = arith.subf %0, %2 : vector<128x16xf32>
    %4 = arith.truncf %3 : vector<128x16xf32> to vector<128x16xbf16>
    %5 = arith.extf %4 : vector<128x16xbf16> to vector<128x16xf32>
    %6 = arith.subf %3, %5 : vector<128x16xf32>
    %c0_1 = arith.constant 0 : index
    %c0_2 = arith.constant 0 : index
    %7 = vector.load %arg4[%c0_1, %c0_2] : memref<128x48xf32, #tpu.memory_space<vmem>>, vector<128x16xf32>
    tpu.vector_store %arg4[%c0_1, %c0_2], %2 {strides = array<i32>} : memref<128x48xf32, #tpu.memory_space<vmem>>, vector<128x16xf32>,
    %c0_3 = arith.constant 0 : index
    %c16 = arith.constant 16 : index
    %8 = vector.load %arg4[%c0_3, %c16] : memref<128x48xf32, #tpu.memory_space<vmem>>, vector<128x16xf32>
    tpu.vector_store %arg4[%c0_3, %c16], %5 {strides = array<i32>} : memref<128x48xf32, #tpu.memory_space<vmem>>, vector<128x16xf32>,
    %c0_4 = arith.constant 0 : index
    %c32 = arith.constant 32 : index
    %9 = vector.load %arg4[%c0_4, %c32] : memref<128x48xf32, #tpu.memory_space<vmem>>, vector<128x16xf32>
    tpu.vector_store %arg4[%c0_4, %c32], %6 {strides = array<i32>} : memref<128x48xf32, #tpu.memory_space<vmem>>, vector<128x16xf32>,
    %c0_5 = arith.constant 0 : index
    %c0_6 = arith.constant 0 : index
    %10 = vector.load %arg4[%c0_5, %c0_6] : memref<128x48xf32, #tpu.memory_space<vmem>>, vector<128x48xf32>
    %c0_7 = arith.constant 0 : index
    %c0_8 = arith.constant 0 : index
    %11 = vector.load %arg1[%c0_7, %c0_8] : memref<48x64xf32, #tpu.memory_space<vmem>>, vector<48x64xf32>
    %cst = arith.constant dense<0.000000e+00> : vector<128x64xf32>
    %12 = tpu.matmul %10, %11, %cst {dimension_numbers = #tpu.dot_dimension_numbers<[1], [0], [0], [1], [0, 0, 1, 1], [], []>} : vector<128x48xf32>, vector<48x64xf32>, vector<128x64xf32> -> vector<128x64xf32>
    %c0_9 = arith.constant 0 : index
    %c0_10 = arith.constant 0 : index
    %13 = vector.load %arg3[%c0_9, %c0_10] : memref<128x64xf32, #tpu.memory_space<vmem>>, vector<128x64xf32>
    tpu.vector_store %arg3[%c0_9, %c0_10], %12 {strides = array<i32>} : memref<128x64xf32, #tpu.memory_space<vmem>>, vector<128x64xf32>,
    return
  }
  func.func @transform_0(%arg0: i32) -> (i32, i32) {
    %c0_i32 = arith.constant 0 : i32
    %c0_i32_0 = arith.constant 0 : i32
    %c0_i32_1 = arith.constant 0 : i32
    return %c0_i32, %c0_i32_0 : i32, i32
  }
  func.func @transform_1(%arg0: i32) -> (i32, i32) {
    %c0_i32 = arith.constant 0 : i32
    %c0_i32_0 = arith.constant 0 : i32
    return %arg0, %c0_i32 : i32, i32
  }
  func.func @transform_2(%arg0: i32) -> (i32, i32) {
    %c0_i32 = arith.constant 0 : i32
    %c0_i32_0 = arith.constant 0 : i32
    return %arg0, %c0_i32 : i32, i32
  }
}

</mosaic_0001>

<llo_original>
// kernel: upsample_nearest.1
$region0: #{upsample_nearest.1}
  #allocation0 [shape = 'u32[]', space=smem, size = 0x4, offset = 0x4, fixed_abs, tag = 'smem constant byte address 0x4 - core index']
  #allocation1 [shape = 'u32[144,128]{1,0:T(1,128)}', space=vmem, size = 0x12000, scoped, tag = 'internal scratch']
  #allocation2 [shape = 'f32[128,48]{1,0:T(8,128)}', space=vmem, size = 0x10000, scoped, tag = 'scratch operand']
  %s0 = inlined_call_operand.hbm [shape: f32[48,64], index: 0, kind: input, shape index: {}]
  %s1 = inlined_call_operand.hbm [shape: f32[128,16], index: 1, kind: input, shape index: {}]
  %s2 = inlined_call_operand.vmem [shape: f32[128,64], index: 2, kind: output, shape index: {}]
  %s3 = sld [smem:[#allocation0]]
  $region26: #{upsample_nearest.1} parent=0
    _
  %s5 = ssub.s32 1, %s3
  %s6 = scalar_select 0, %s5, %s3
  $region1: #{upsample_nearest.1} parent=0
    #allocation3 [shape = 'u8[24576]{0}', space=vmem, size = 0x6000, scoped, tag = 'input window, operand 0, single buffered']
    #allocation4 [shape = 's32[1]{0}', space=sflag, size = 0x4, scoped, tag = 'scoped memory for upsample_nearest.1']
    #allocation5 [shape = 'u8[65536]{0}', space=vmem, size = 0x10000, scoped, tag = 'input window, operand 1, single buffered']
    #allocation6 [shape = 's32[1]{0}', space=sflag, size = 0x4, scoped, tag = 'scoped memory for upsample_nearest.1']
    %7 = vsyncpa [#allocation4], 0
    %8 = vsyncpa [#allocation6], 0
    // Predicated region
    $region2: #{upsample_nearest.1} parent=1 // pred_check
      _
    $region3: #{upsample_nearest.1} parent=1 // pred_check_branch
      %10 = sbr.rel (0) target = $region5
    $region4: #{upsample_nearest.1} parent=1 // pred_region
      %s12 = ssub.s32 768, 768
      %13 = vsyncadd [#allocation4], %s12
      %s14 = sshll.u32 [#allocation3], 4
      %s15 = int_to_ptr.vmem [resolvable:$true] %s14
      %20 = dma.hbm_to_vmem [thread:$0]  %s0, 768, %s15, [#allocation4], 128, 128, 8
    $region5: #{upsample_nearest.1} parent=1 // pred_fallthru
      _
    // Predicated region
    $region6: #{upsample_nearest.1} parent=1 // pred_check
      _
    $region7: #{upsample_nearest.1} parent=1 // pred_check_branch
      %22 = sbr.rel (0) target = $region9
    $region8: #{upsample_nearest.1} parent=1 // pred_region
      %s24 = ssub.s32 2048, 2048
      %25 = vsyncadd [#allocation6], %s24
      %s26 = sshll.u32 [#allocation5], 4
      %s27 = int_to_ptr.vmem [resolvable:$true] %s26
      %32 = dma.hbm_to_vmem [thread:$0]  %s1, 2048, %s27, [#allocation6], 128, 128, 8
    $region9: #{upsample_nearest.1} parent=1 // pred_fallthru
      _
    // Predicated region
    $region10: #{upsample_nearest.1} parent=1 // pred_check
      _
    $region11: #{upsample_nearest.1} parent=1 // pred_check_branch
      %34 = sbr.rel (0) target = $region13
    $region12: #{upsample_nearest.1} parent=1 // pred_region
      %35 = dma.done [#allocation4], 768
    $region13: #{upsample_nearest.1} parent=1 // pred_fallthru
      _
    // Predicated region
    $region14: #{upsample_nearest.1} parent=1 // pred_check
      _
    $region15: #{upsample_nearest.1} parent=1 // pred_check_branch
      %37 = sbr.rel (0) target = $region17
    $region16: #{upsample_nearest.1} parent=1 // pred_region
      %38 = dma.done [#allocation6], 2048
    $region17: #{upsample_nearest.1} parent=1 // pred_fallthru
      _
    %v39 = vld [vmem:[#allocation5] sm:$0xff]
    %v40 = vld [vmem:[#allocation5 + $0x8] sm:$0xff]
    %v41 = vld [vmem:[#allocation5 + $0x10] sm:$0xff]
    %v42 = vld [vmem:[#allocation5 + $0x18] sm:$0xff]
    %v43 = vld [vmem:[#allocation5 + $0x20] sm:$0xff]
    %v44 = vld [vmem:[#allocation5 + $0x28] sm:$0xff]
    %v45 = vld [vmem:[#allocation5 + $0x30] sm:$0xff]
    %v46 = vld [vmem:[#allocation5 + $0x38] sm:$0xff]
    %v47 = vld [vmem:[#allocation5 + $0x40] sm:$0xff]
    %v48 = vld [vmem:[#allocation5 + $0x48] sm:$0xff]
    %v49 = vld [vmem:[#allocation5 + $0x50] sm:$0xff]
    %v50 = vld [vmem:[#allocation5 + $0x58] sm:$0xff]
    %v51 = vld [vmem:[#allocation5 + $0x60] sm:$0xff]
    %v52 = vld [vmem:[#allocation5 + $0x68] sm:$0xff]
    %v53 = vld [vmem:[#allocation5 + $0x70] sm:$0xff]
    %v54 = vld [vmem:[#allocation5 + $0x78] sm:$0xff]
    %v55 = vpack.c.bf16 %v40, %v39
    %v56 = vpack.c.bf16 %v42, %v41
    %v57 = vpack.c.bf16 %v44, %v43
    %v58 = vpack.c.bf16 %v46, %v45
    %v59 = vpack.c.bf16 %v48, %v47
    %v60 = vpack.c.bf16 %v50, %v49
    %v61 = vpack.c.bf16 %v52, %v51
    %v62 = vpack.c.bf16 %v54, %v53
    %v63 = vunpack.c.l.bf16 %v55
    %v64 = vunpack.c.h.bf16 %v55
    %v65 = vunpack.c.l.bf16 %v56
    %v66 = vunpack.c.h.bf16 %v56
    %v67 = vunpack.c.l.bf16 %v57
    %v68 = vunpack.c.h.bf16 %v57
    %v69 = vunpack.c.l.bf16 %v58
    %v70 = vunpack.c.h.bf16 %v58
    %v71 = vunpack.c.l.bf16 %v59
    %v72 = vunpack.c.h.bf16 %v59
    %v73 = vunpack.c.l.bf16 %v60
    %v74 = vunpack.c.h.bf16 %v60
    %v75 = vunpack.c.l.bf16 %v61
    %v76 = vunpack.c.h.bf16 %v61
    %v77 = vunpack.c.l.bf16 %v62
    %v78 = vunpack.c.h.bf16 %v62
    %v79 = vsub.f32 %v39, %v63
    %v80 = vsub.f32 %v40, %v64
    %v81 = vsub.f32 %v41, %v65
    %v82 = vsub.f32 %v42, %v66
    %v83 = vsub.f32 %v43, %v67
    %v84 = vsub.f32 %v44, %v68
    %v85 = vsub.f32 %v45, %v69
    %v86 = vsub.f32 %v46, %v70
    %v87 = vsub.f32 %v47, %v71
    %v88 = vsub.f32 %v48, %v72
    %v89 = vsub.f32 %v49, %v73
    %v90 = vsub.f32 %v50, %v74
    %v91 = vsub.f32 %v51, %v75
    %v92 = vsub.f32 %v52, %v76
    %v93 = vsub.f32 %v53, %v77
    %v94 = vsub.f32 %v54, %v78
    %v95 = vpack.c.bf16 %v80, %v79
    %v96 = vpack.c.bf16 %v82, %v81
    %v97 = vpack.c.bf16 %v84, %v83
    %v98 = vpack.c.bf16 %v86, %v85
    %v99 = vpack.c.bf16 %v88, %v87
    %v100 = vpack.c.bf16 %v90, %v89
    %v101 = vpack.c.bf16 %v92, %v91
    %v102 = vpack.c.bf16 %v94, %v93
    %v103 = vunpack.c.l.bf16 %v95
    %v104 = vunpack.c.h.bf16 %v95
    %v105 = vunpack.c.l.bf16 %v96
    %v106 = vunpack.c.h.bf16 %v96
    %v107 = vunpack.c.l.bf16 %v97
    %v108 = vunpack.c.h.bf16 %v97
    %v109 = vunpack.c.l.bf16 %v98
    %v110 = vunpack.c.h.bf16 %v98
    %v111 = vunpack.c.l.bf16 %v99
    %v112 = vunpack.c.h.bf16 %v99
    %v113 = vunpack.c.l.bf16 %v100
    %v114 = vunpack.c.h.bf16 %v100
    %v115 = vunpack.c.l.bf16 %v101
    %v116 = vunpack.c.h.bf16 %v101
    %v117 = vunpack.c.l.bf16 %v102
    %v118 = vunpack.c.h.bf16 %v102
    %v119 = vsub.f32 %v79, %v103
    %v120 = vsub.f32 %v80, %v104
    %v121 = vsub.f32 %v81, %v105
    %v122 = vsub.f32 %v82, %v106
    %v123 = vsub.f32 %v83, %v107
    %v124 = vsub.f32 %v84, %v108
    %v125 = vsub.f32 %v85, %v109
    %v126 = vsub.f32 %v86, %v110
    %v127 = vsub.f32 %v87, %v111
    %v128 = vsub.f32 %v88, %v112
    %v129 = vsub.f32 %v89, %v113
    %v130 = vsub.f32 %v90, %v114
    %v131 = vsub.f32 %v91, %v115
    %v132 = vsub.f32 %v92, %v116
    %v133 = vsub.f32 %v93, %v117
    %v134 = vsub.f32 %v94, %v118
    %vm135 = vcmask 130048
    %136 = vst.msk [vmem:[#allocation2] sm:$0xff] %vm135, %v63
    %137 = vst.msk [vmem:[#allocation2 + $0x8] sm:$0xff] %vm135, %v64
    %138 = vst.msk [vmem:[#allocation2 + $0x10] sm:$0xff] %vm135, %v65
    %139 = vst.msk [vmem:[#allocation2 + $0x18] sm:$0xff] %vm135, %v66
    %140 = vst.msk [vmem:[#allocation2 + $0x20] sm:$0xff] %vm135, %v67
    %141 = vst.msk [vmem:[#allocation2 + $0x28] sm:$0xff] %vm135, %v68
    %142 = vst.msk [vmem:[#allocation2 + $0x30] sm:$0xff] %vm135, %v69
    %143 = vst.msk [vmem:[#allocation2 + $0x38] sm:$0xff] %vm135, %v70
    %144 = vst.msk [vmem:[#allocation2 + $0x40] sm:$0xff] %vm135, %v71
    %145 = vst.msk [vmem:[#allocation2 + $0x48] sm:$0xff] %vm135, %v72
    %146 = vst.msk [vmem:[#allocation2 + $0x50] sm:$0xff] %vm135, %v73
    %147 = vst.msk [vmem:[#allocation2 + $0x58] sm:$0xff] %vm135, %v74
    %148 = vst.msk [vmem:[#allocation2 + $0x60] sm:$0xff] %vm135, %v75
    %149 = vst.msk [vmem:[#allocation2 + $0x68] sm:$0xff] %vm135, %v76
    %150 = vst.msk [vmem:[#allocation2 + $0x70] sm:$0xff] %vm135, %v77
    %151 = vst.msk [vmem:[#allocation2 + $0x78] sm:$0xff] %vm135, %v78
    %168 = vrot.lane.b32.xlu0 %v103, 16
    %v169 = vpop.permute.xlu0 %168
    %170 = vrot.lane.b32.xlu0 %v104, 16
    %v171 = vpop.permute.xlu0 %170
    %172 = vrot.lane.b32.xlu0 %v105, 16
    %v173 = vpop.permute.xlu0 %172
    %174 = vrot.lane.b32.xlu0 %v106, 16
    %v175 = vpop.permute.xlu0 %174
    %176 = vrot.lane.b32.xlu0 %v107, 16
    %v177 = vpop.permute.xlu0 %176
    %178 = vrot.lane.b32.xlu0 %v108, 16
    %v179 = vpop.permute.xlu0 %178
    %180 = vrot.lane.b32.xlu0 %v109, 16
    %v181 = vpop.permute.xlu0 %180
    %182 = vrot.lane.b32.xlu0 %v110, 16
    %v183 = vpop.permute.xlu0 %182
    %184 = vrot.lane.b32.xlu0 %v111, 16
    %v185 = vpop.permute.xlu0 %184
    %186 = vrot.lane.b32.xlu0 %v112, 16
    %v187 = vpop.permute.xlu0 %186
    %188 = vrot.lane.b32.xlu0 %v113, 16
    %v189 = vpop.permute.xlu0 %188
    %190 = vrot.lane.b32.xlu0 %v114, 16
    %v191 = vpop.permute.xlu0 %190
    %192 = vrot.lane.b32.xlu0 %v115, 16
    %v193 = vpop.permute.xlu0 %192
    %194 = vrot.lane.b32.xlu0 %v116, 16
    %v195 = vpop.permute.xlu0 %194
    %196 = vrot.lane.b32.xlu0 %v117, 16
    %v197 = vpop.permute.xlu0 %196
    %198 = vrot.lane.b32.xlu0 %v118, 16
    %v199 = vpop.permute.xlu0 %198
    %vm216 = vcmask 261248
    %217 = vst.msk [vmem:[#allocation2] sm:$0xff] %vm216, %v169
    %218 = vst.msk [vmem:[#allocation2 + $0x8] sm:$0xff] %vm216, %v171
    %219 = vst.msk [vmem:[#allocation2 + $0x10] sm:$0xff] %vm216, %v173
    %220 = vst.msk [vmem:[#allocation2 + $0x18] sm:$0xff] %vm216, %v175
    %221 = vst.msk [vmem:[#allocation2 + $0x20] sm:$0xff] %vm216, %v177
    %222 = vst.msk [vmem:[#allocation2 + $0x28] sm:$0xff] %vm216, %v179
    %223 = vst.msk [vmem:[#allocation2 + $0x30] sm:$0xff] %vm216, %v181
    %224 = vst.msk [vmem:[#allocation2 + $0x38] sm:$0xff] %vm216, %v183
    %225 = vst.msk [vmem:[#allocation2 + $0x40] sm:$0xff] %vm216, %v185
    %226 = vst.msk [vmem:[#allocation2 + $0x48] sm:$0xff] %vm216, %v187
    %227 = vst.msk [vmem:[#allocation2 + $0x50] sm:$0xff] %vm216, %v189
    %228 = vst.msk [vmem:[#allocation2 + $0x58] sm:$0xff] %vm216, %v191
    %229 = vst.msk [vmem:[#allocation2 + $0x60] sm:$0xff] %vm216, %v193
    %230 = vst.msk [vmem:[#allocation2 + $0x68] sm:$0xff] %vm216, %v195
    %231 = vst.msk [vmem:[#allocation2 + $0x70] sm:$0xff] %vm216, %v197
    %232 = vst.msk [vmem:[#allocation2 + $0x78] sm:$0xff] %vm216, %v199
    %249 = vrot.lane.b32.xlu0 %v119, 32
    %v250 = vpop.permute.xlu0 %249
    %251 = vrot.lane.b32.xlu0 %v120, 32
    %v252 = vpop.permute.xlu0 %251
    %253 = vrot.lane.b32.xlu0 %v121, 32
    %v254 = vpop.permute.xlu0 %253
    %255 = vrot.lane.b32.xlu0 %v122, 32
    %v256 = vpop.permute.xlu0 %255
    %257 = vrot.lane.b32.xlu0 %v123, 32
    %v258 = vpop.permute.xlu0 %257
    %259 = vrot.lane.b32.xlu0 %v124, 32
    %v260 = vpop.permute.xlu0 %259
    %261 = vrot.lane.b32.xlu0 %v125, 32
    %v262 = vpop.permute.xlu0 %261
    %263 = vrot.lane.b32.xlu0 %v126, 32
    %v264 = vpop.permute.xlu0 %263
    %265 = vrot.lane.b32.xlu0 %v127, 32
    %v266 = vpop.permute.xlu0 %265
    %267 = vrot.lane.b32.xlu0 %v128, 32
    %v268 = vpop.permute.xlu0 %267
    %269 = vrot.lane.b32.xlu0 %v129, 32
    %v270 = vpop.permute.xlu0 %269
    %271 = vrot.lane.b32.xlu0 %v130, 32
    %v272 = vpop.permute.xlu0 %271
    %273 = vrot.lane.b32.xlu0 %v131, 32
    %v274 = vpop.permute.xlu0 %273
    %275 = vrot.lane.b32.xlu0 %v132, 32
    %v276 = vpop.permute.xlu0 %275
    %277 = vrot.lane.b32.xlu0 %v133, 32
    %v278 = vpop.permute.xlu0 %277
    %279 = vrot.lane.b32.xlu0 %v134, 32
    %v280 = vpop.permute.xlu0 %279
    %vm297 = vcmask 392448
    %298 = vst.msk [vmem:[#allocation2] sm:$0xff] %vm297, %v250
    %299 = vst.msk [vmem:[#allocation2 + $0x8] sm:$0xff] %vm297, %v252
    %300 = vst.msk [vmem:[#allocation2 + $0x10] sm:$0xff] %vm297, %v254
    %301 = vst.msk [vmem:[#allocation2 + $0x18] sm:$0xff] %vm297, %v256
    %302 = vst.msk [vmem:[#allocation2 + $0x20] sm:$0xff] %vm297, %v258
    %303 = vst.msk [vmem:[#allocation2 + $0x28] sm:$0xff] %vm297, %v260
    %304 = vst.msk [vmem:[#allocation2 + $0x30] sm:$0xff] %vm297, %v262
    %305 = vst.msk [vmem:[#allocation2 + $0x38] sm:$0xff] %vm297, %v264
    %306 = vst.msk [vmem:[#allocation2 + $0x40] sm:$0xff] %vm297, %v266
    %307 = vst.msk [vmem:[#allocation2 + $0x48] sm:$0xff] %vm297, %v268
    %308 = vst.msk [vmem:[#allocation2 + $0x50] sm:$0xff] %vm297, %v270
    %309 = vst.msk [vmem:[#allocation2 + $0x58] sm:$0xff] %vm297, %v272
    %310 = vst.msk [vmem:[#allocation2 + $0x60] sm:$0xff] %vm297, %v274
    %311 = vst.msk [vmem:[#allocation2 + $0x68] sm:$0xff] %vm297, %v276
    %312 = vst.msk [vmem:[#allocation2 + $0x70] sm:$0xff] %vm297, %v278
    %313 = vst.msk [vmem:[#allocation2 + $0x78] sm:$0xff] %vm297, %v280
    %v314 = vld [vmem:[#allocation2] sm:$0xff]
    %v315 = vld [vmem:[#allocation2 + $0x8] sm:$0xff]
    %v316 = vld [vmem:[#allocation2 + $0x10] sm:$0xff]
    %v317 = vld [vmem:[#allocation2 + $0x18] sm:$0xff]
    %v318 = vld [vmem:[#allocation2 + $0x20] sm:$0xff]
    %v319 = vld [vmem:[#allocation2 + $0x28] sm:$0xff]
    %v320 = vld [vmem:[#allocation2 + $0x30] sm:$0xff]
    %v321 = vld [vmem:[#allocation2 + $0x38] sm:$0xff]
    %v322 = vld [vmem:[#allocation2 + $0x40] sm:$0xff]
    %v323 = vld [vmem:[#allocation2 + $0x48] sm:$0xff]
    %v324 = vld [vmem:[#allocation2 + $0x50] sm:$0xff]
    %v325 = vld [vmem:[#allocation2 + $0x58] sm:$0xff]
    %v326 = vld [vmem:[#allocation2 + $0x60] sm:$0xff]
    %v327 = vld [vmem:[#allocation2 + $0x68] sm:$0xff]
    %v328 = vld [vmem:[#allocation2 + $0x70] sm:$0xff]
    %v329 = vld [vmem:[#allocation2 + $0x78] sm:$0xff]
    %v330 = vld [vmem:[#allocation3] sm:$0xff]
    %v331 = vld [vmem:[#allocation3 + $0x8] sm:$0xff]
    %v332 = vld [vmem:[#allocation3 + $0x10] sm:$0xff]
    %v333 = vld [vmem:[#allocation3 + $0x18] sm:$0xff]
    %v334 = vld [vmem:[#allocation3 + $0x20] sm:$0xff]
    %v335 = vld [vmem:[#allocation3 + $0x28] sm:$0xff]
    %vm336 = vcmask 392192
    %v338 = vsel %vm336, %v314, 0
    %v341 = vsel %vm336, %v315, 0
    %v344 = vsel %vm336, %v316, 0
    %v347 = vsel %vm336, %v317, 0
    %v350 = vsel %vm336, %v318, 0
    %v353 = vsel %vm336, %v319, 0
    %v356 = vsel %vm336, %v320, 0
    %v359 = vsel %vm336, %v321, 0
    %v362 = vsel %vm336, %v322, 0
    %v365 = vsel %vm336, %v323, 0
    %v368 = vsel %vm336, %v324, 0
    %v371 = vsel %vm336, %v325, 0
    %v374 = vsel %vm336, %v326, 0
    %v377 = vsel %vm336, %v327, 0
    %v380 = vsel %vm336, %v328, 0
    %v383 = vsel %vm336, %v329, 0
    %385 = vmatprep.subr.mxu0 0.0
    %386 = vmatpush1.msra.mxu0 %v330
    %387 = vmatprep.subr.mxu0 0.0
    %388 = vmatpush1.msra.mxu0 %v331
    %389 = vmatprep.subr.mxu0 0.0
    %390 = vmatpush1.msra.mxu0 %v332
    %391 = vmatprep.subr.mxu0 0.0
    %392 = vmatpush1.msra.mxu0 %v333
    %393 = vmatprep.subr.mxu0 0.0
    %394 = vmatpush1.msra.mxu0 %v334
    %395 = vmatprep.subr.mxu0 0.0
    %396 = vmatpush1.msra.mxu0 %v335
    %397 = vmatprep.subr.mxu0 0.0
    %398 = vmatpush1.msra.mxu0 0.0
    %399 = vmatprep.subr.mxu0 0.0
    %400 = vmatpush1.msra.mxu0 0.0
    %401 = vmatprep.subr.mxu0 0.0
    %402 = vmatpush1.msra.mxu0 0.0
    %403 = vmatprep.subr.mxu0 0.0
    %404 = vmatpush1.msra.mxu0 0.0
    %405 = vmatprep.subr.mxu0 0.0
    %406 = vmatpush1.msra.mxu0 0.0
    %407 = vmatprep.subr.mxu0 0.0
    %408 = vmatpush1.msra.mxu0 0.0
    %409 = vmatprep.subr.mxu0 0.0
    %410 = vmatpush1.msra.mxu0 0.0
    %411 = vmatprep.subr.mxu0 0.0
    %412 = vmatpush1.msra.mxu0 0.0
    %413 = vmatprep.subr.mxu0 0.0
    %414 = vmatpush1.msra.mxu0 0.0
    %415 = vmatprep.subr.mxu0 0.0
    %416 = vmatpush1.msra.mxu0 0.0
    %417 = vmatprep.subr.mxu0 0.0
    %418 = vmatpush1.msra.mxu0 0.0
    %419 = vmatprep.subr.mxu0 0.0
    %420 = vmatpush1.msra.mxu0 0.0
    %421 = vmatprep.subr.mxu0 0.0
    %422 = vmatpush1.msra.mxu0 0.0
    %423 = vmatprep.subr.mxu0 0.0
    %424 = vmatpush1.msra.mxu0 0.0
    %425 = vmatprep.subr.mxu0 0.0
    %426 = vmatpush1.msra.mxu0 0.0
    %427 = vmatprep.subr.mxu0 0.0
    %428 = vmatpush1.msra.mxu0 0.0
    %429 = vmatprep.subr.mxu0 0.0
    %430 = vmatpush1.msra.mxu0 0.0
    %431 = vmatprep.subr.mxu0 0.0
    %432 = vmatpush1.msra.mxu0 0.0
    %433 = vmatprep.subr.mxu0 0.0
    %434 = vmatpush1.msra.mxu0 0.0
    %435 = vmatprep.subr.mxu0 0.0
    %436 = vmatpush1.msra.mxu0 0.0
    %437 = vmatprep.subr.mxu0 0.0
    %438 = vmatpush1.msra.mxu0 0.0
    %439 = vmatprep.subr.mxu0 0.0
    %440 = vmatpush1.msra.mxu0 0.0
    %441 = vmatprep.subr.mxu0 0.0
    %442 = vmatpush1.msra.mxu0 0.0
    %443 = vmatprep.subr.mxu0 0.0
    %444 = vmatpush1.msra.mxu0 0.0
    %445 = vmatprep.subr.mxu0 0.0
    %446 = vmatpush1.msra.mxu0 0.0
    %447 = vmatprep.subr.mxu0 0.0
    %448 = vmatpush1.msra.mxu0 0.0
    %449 = vmatprep.mubr.f32.mxu0 0.0
    %450 = vmatmul.mubr.f32.gmra.mrb[0].mxu0 %v338
    %v451 = vpop.f32.mrb[0].mxu0
    %v452 = vadd.f32 0.0, %v451
    %v453 = vpop.f32.mrb[0].mxu0
    %454 = vmatprep.mubr.f32.mxu0 0.0
    %455 = vmatmul.mubr.f32.gmra.mrb[0].mxu0 %v341
    %v456 = vpop.f32.mrb[0].mxu0
    %v457 = vadd.f32 0.0, %v456
    %v458 = vpop.f32.mrb[0].mxu0
    %459 = vmatprep.mubr.f32.mxu0 0.0
    %460 = vmatmul.mubr.f32.gmra.mrb[0].mxu0 %v344
    %v461 = vpop.f32.mrb[0].mxu0
    %v462 = vadd.f32 0.0, %v461
    %v463 = vpop.f32.mrb[0].mxu0
    %464 = vmatprep.mubr.f32.mxu0 0.0
    %465 = vmatmul.mubr.f32.gmra.mrb[0].mxu0 %v347
    %v466 = vpop.f32.mrb[0].mxu0
    %v467 = vadd.f32 0.0, %v466
    %v468 = vpop.f32.mrb[0].mxu0
    %469 = vmatprep.mubr.f32.mxu0 0.0
    %470 = vmatmul.mubr.f32.gmra.mrb[0].mxu0 %v350
    %v471 = vpop.f32.mrb[0].mxu0
    %v472 = vadd.f32 0.0, %v471
    %v473 = vpop.f32.mrb[0].mxu0
    %474 = vmatprep.mubr.f32.mxu0 0.0
    %475 = vmatmul.mubr.f32.gmra.mrb[0].mxu0 %v353
    %v476 = vpop.f32.mrb[0].mxu0
    %v477 = vadd.f32 0.0, %v476
    %v478 = vpop.f32.mrb[0].mxu0
    %479 = vmatprep.mubr.f32.mxu0 0.0
    %480 = vmatmul.mubr.f32.gmra.mrb[0].mxu0 %v356
    %v481 = vpop.f32.mrb[0].mxu0
    %v482 = vadd.f32 0.0, %v481
    %v483 = vpop.f32.mrb[0].mxu0
    %484 = vmatprep.mubr.f32.mxu0 0.0
    %485 = vmatmul.mubr.f32.gmra.mrb[0].mxu0 %v359
    %v486 = vpop.f32.mrb[0].mxu0
    %v487 = vadd.f32 0.0, %v486
    %v488 = vpop.f32.mrb[0].mxu0
    %489 = vmatprep.mubr.f32.mxu0 0.0
    %490 = vmatmul.mubr.f32.gmra.mrb[0].mxu0 %v362
    %v491 = vpop.f32.mrb[0].mxu0
    %v492 = vadd.f32 0.0, %v491
    %v493 = vpop.f32.mrb[0].mxu0
    %494 = vmatprep.mubr.f32.mxu0 0.0
    %495 = vmatmul.mubr.f32.gmra.mrb[0].mxu0 %v365
    %v496 = vpop.f32.mrb[0].mxu0
    %v497 = vadd.f32 0.0, %v496
    %v498 = vpop.f32.mrb[0].mxu0
    %499 = vmatprep.mubr.f32.mxu0 0.0
    %500 = vmatmul.mubr.f32.gmra.mrb[0].mxu0 %v368
    %v501 = vpop.f32.mrb[0].mxu0
    %v502 = vadd.f32 0.0, %v501
    %v503 = vpop.f32.mrb[0].mxu0
    %504 = vmatprep.mubr.f32.mxu0 0.0
    %505 = vmatmul.mubr.f32.gmra.mrb[0].mxu0 %v371
    %v506 = vpop.f32.mrb[0].mxu0
    %v507 = vadd.f32 0.0, %v506
    %v508 = vpop.f32.mrb[0].mxu0
    %509 = vmatprep.mubr.f32.mxu0 0.0
    %510 = vmatmul.mubr.f32.gmra.mrb[0].mxu0 %v374
    %v511 = vpop.f32.mrb[0].mxu0
    %v512 = vadd.f32 0.0, %v511
    %v513 = vpop.f32.mrb[0].mxu0
    %514 = vmatprep.mubr.f32.mxu0 0.0
    %515 = vmatmul.mubr.f32.gmra.mrb[0].mxu0 %v377
    %v516 = vpop.f32.mrb[0].mxu0
    %v517 = vadd.f32 0.0, %v516
    %v518 = vpop.f32.mrb[0].mxu0
    %519 = vmatprep.mubr.f32.mxu0 0.0
    %520 = vmatmul.mubr.f32.gmra.mrb[0].mxu0 %v380
    %v521 = vpop.f32.mrb[0].mxu0
    %v522 = vadd.f32 0.0, %v521
    %v523 = vpop.f32.mrb[0].mxu0
    %524 = vmatprep.mubr.f32.mxu0 0.0
    %525 = vmatmul.mubr.f32.gmra.mrb[0].mxu0 %v383
    %v526 = vpop.f32.mrb[0].mxu0
    %v527 = vadd.f32 0.0, %v526
    %v528 = vpop.f32.mrb[0].mxu0
    %529 = vdwg.mxu0
    %vm530 = vcmask 523264
    %531 = vst.msk [vmem:[%s2] sm:$0xff] %vm530, %v452
    %532 = vst.msk [vmem:[%s2 + $0x8] sm:$0xff] %vm530, %v457
    %533 = vst.msk [vmem:[%s2 + $0x10] sm:$0xff] %vm530, %v462
    %534 = vst.msk [vmem:[%s2 + $0x18] sm:$0xff] %vm530, %v467
    %535 = vst.msk [vmem:[%s2 + $0x20] sm:$0xff] %vm530, %v472
    %536 = vst.msk [vmem:[%s2 + $0x28] sm:$0xff] %vm530, %v477
    %537 = vst.msk [vmem:[%s2 + $0x30] sm:$0xff] %vm530, %v482
    %538 = vst.msk [vmem:[%s2 + $0x38] sm:$0xff] %vm530, %v487
    %539 = vst.msk [vmem:[%s2 + $0x40] sm:$0xff] %vm530, %v492
    %540 = vst.msk [vmem:[%s2 + $0x48] sm:$0xff] %vm530, %v497
    %541 = vst.msk [vmem:[%s2 + $0x50] sm:$0xff] %vm530, %v502
    %542 = vst.msk [vmem:[%s2 + $0x58] sm:$0xff] %vm530, %v507
    %543 = vst.msk [vmem:[%s2 + $0x60] sm:$0xff] %vm530, %v512
    %544 = vst.msk [vmem:[%s2 + $0x68] sm:$0xff] %vm530, %v517
    %545 = vst.msk [vmem:[%s2 + $0x70] sm:$0xff] %vm530, %v522
    %546 = vst.msk [vmem:[%s2 + $0x78] sm:$0xff] %vm530, %v527
    // Predicated region
    $region18: #{upsample_nearest.1} parent=1 // pred_check
      _
    $region19: #{upsample_nearest.1} parent=1 // pred_check_branch
      %548 = sbr.rel (0) target = $region21
    $region20: #{upsample_nearest.1} parent=1 // pred_region
      _
    $region21: #{upsample_nearest.1} parent=1 // pred_fallthru
      _
    // Predicated region
    $region22: #{upsample_nearest.1} parent=1 // pred_check
      _
    $region23: #{upsample_nearest.1} parent=1 // pred_check_branch
      %550 = sbr.rel (0) target = $region25
    $region24: #{upsample_nearest.1} parent=1 // pred_region
      _
    $region25: #{upsample_nearest.1} parent=1 // pred_fallthru
      _
    %551 = vsyncpa [#allocation4], 1
    %552 = vsyncpa [#allocation6], 1

</llo_original>
